<compile_context>
chip_gen: v7x
topology: tpu7x:2x2x1
jax: 0.10.0
libtpu: 0.0.40
codegen_flags: <defaults>
</compile_context>

<pallas_src>
import jax
import jax.numpy as jnp
from jax.experimental import pallas as pl
from jax.experimental.pallas import tpu as pltpu


def _pick_row_tile(h2, w2, itemsize, budget_bytes=20 * 1024 * 1024):
    """Row tile: multiple of 8, <= h2, double-buffered in+out blocks
    (2 * (6 + 12) * TH * W2 * itemsize) within the VMEM budget.  Prefers an
    exact divisor of h2; otherwise the cdiv grid handles the ragged edge."""
    if h2 <= 8:
        return h2
    fits = [t for t in (512, 256, 128, 64, 32, 16, 8)
            if t <= h2 and 2 * 18 * t * w2 * itemsize <= budget_bytes]
    if not fits:
        return 8
    for t in fits:
        if h2 % t == 0:
            return t          # exact tiling: no ragged edge blocks
    return fits[0]            # ragged edge: padded read / masked writeback


def _pick_col_chunk(w2):
    """Column-chunk width for the in-kernel interleave matmuls (K dim)."""
    for tw in (128, 64, 32, 16, 8):
        if w2 % tw == 0:
            return tw
    return w2                 # small / odd widths: single full-width chunk


def _yuv420_to_444_kernel(x_ref, e0_ref, e1_ref, euv_ref, o_ref):
    # x_ref  : (1, 6, TH, W2)   packed [y00, y01, y10, y11, u, v]
    # e*_ref : (TW, 2*TW)       binary column scatter / duplicate matrices
    # o_ref  : (1, 3, TH, 2*W)  view row h = [out row 2h | out row 2h+1]
    e0 = e0_ref[...]
    e1 = e1_ref[...]
    euv = euv_ref[...]
    odt = o_ref.dtype

    w2 = x_ref.shape[-1]
    tw = e0_ref.shape[0]
    width = o_ref.shape[-1] // 2      # = W = 2*W2
    n_chunks = w2 // tw

    def mm(a, b):
        return jnp.dot(a, b, preferred_element_type=jnp.float32)

    for c in range(n_chunks):         # static unroll over column chunks
        lo = c * tw
        hi = lo + tw
        olo = 2 * lo
        ohi = 2 * hi

        y00 = x_ref[0, 0, :, lo:hi]
        y01 = x_ref[0, 1, :, lo:hi]
        y10 = x_ref[0, 2, :, lo:hi]
        y11 = x_ref[0, 3, :, lo:hi]
        u = x_ref[0, 4, :, lo:hi]
        v = x_ref[0, 5, :, lo:hi]

        # Y plane (pixel shuffle): even output rows from (y00, y01), odd rows
        # from (y10, y11); columns interleaved via exact binary scatter
        # matmuls on the MXU.  Row interleave is handled by the output view.
        o_ref[0, 0, :, olo:ohi] = (mm(y00, e0) + mm(y01, e1)).astype(odt)
        o_ref[0, 0, :, width + olo:width + ohi] = (
            mm(y10, e0) + mm(y11, e1)).astype(odt)

        # Chroma (nearest x2): euv duplicates columns in one matmul; row
        # duplication is just storing the same slab to both row phases.
        uu = mm(u, euv).astype(odt)
        o_ref[0, 1, :, olo:ohi] = uu
        o_ref[0, 1, :, width + olo:width + ohi] = uu

        vv = mm(v, euv).astype(odt)
        o_ref[0, 2, :, olo:ohi] = vv
        o_ref[0, 2, :, width + olo:width + ohi] = vv


def yuv420_to_yuv444(x, mode="nearest"):
    # TODO(synk): only the nearest-neighbor chroma mode (DEFAULT mode) is
    # implemented; the bilinear chroma mode of colorspace_420_to_444 is not ported.
    assert mode == "nearest"
    B, C, H2, W2 = x.shape
    assert C == 6, "YUV420 packed layout expects 6 channels [y00,y01,y10,y11,u,v]"
    H, W = 2 * H2, 2 * W2
    dt = x.dtype
    itemsize = jnp.dtype(dt).itemsize

    TH = _pick_row_tile(H2, W2, itemsize)
    TW = _pick_col_chunk(W2)

    # Binary column-scatter matrices for ONE column chunk (translation
    # invariant, so a single (TW, 2*TW) set is reused for every chunk and
    # stays resident in VMEM across the whole grid).
    #   e0 : col w -> 2w,  e1 : col w -> 2w+1,  euv = e0 + e1 (duplicate).
    wr = jnp.arange(TW)
    e0 = jnp.zeros((TW, 2 * TW), dt).at[wr, 2 * wr].set(1)
    e1 = jnp.zeros((TW, 2 * TW), dt).at[wr, 2 * wr + 1].set(1)
    euv = e0 + e1

    grid = (B, pl.cdiv(H2, TH))

    out_view = pl.pallas_call(
        _yuv420_to_444_kernel,
        out_shape=jax.ShapeDtypeStruct((B, 3, H2, 2 * W), dt),
        grid_spec=pltpu.PrefetchScalarGridSpec(
            num_scalar_prefetch=0,
            grid=grid,
            in_specs=[
                pl.BlockSpec((1, 6, TH, W2), lambda b, i: (b, 0, i, 0)),
                pl.BlockSpec((TW, 2 * TW), lambda b, i: (0, 0)),
                pl.BlockSpec((TW, 2 * TW), lambda b, i: (0, 0)),
                pl.BlockSpec((TW, 2 * TW), lambda b, i: (0, 0)),
            ],
            out_specs=pl.BlockSpec((1, 3, TH, 2 * W), lambda b, i: (b, 0, i, 0)),
        ),
        compiler_params=pltpu.CompilerParams(
            dimension_semantics=("parallel", "parallel"),
            vmem_limit_bytes=48 * 1024 * 1024,
        ),
    )(x, e0, e1, euv)

    # (B, 3, H2, 2*W) row-major is byte-identical to (B, 3, H, W): free view.
    return out_view.reshape(B, 3, H, W)


def _ref_420_to_444(x):
    # Pure-JAX reference (pixel shuffle + nearest upsample), for verification.
    B, _, H2, W2 = x.shape
    ys = x[:, :4].reshape(B, 2, 2, H2, W2)               # [b, i, j, h, w]
    y = ys.transpose(0, 3, 1, 4, 2).reshape(B, 2 * H2, 2 * W2)
    u = jnp.repeat(jnp.repeat(x[:, 4], 2, axis=1), 2, axis=2)
    v = jnp.repeat(jnp.repeat(x[:, 5], 2, axis=1), 2, axis=2)
    return jnp.stack([y, u, v], axis=1)


if __name__ == "__main__":
    key = jax.random.PRNGKey(0)
    B, H2, W2 = 2, 24, 16                   # -> output (2, 3, 48, 32)
    x = jax.random.uniform(key, (B, 6, H2, W2), dtype=jnp.float32)

    out = yuv420_to_yuv444(x)
    out = jax.block_until_ready(out)

    ref = _ref_420_to_444(x)
    assert out.shape == (B, 3, 2 * H2, 2 * W2)
    assert out.dtype == x.dtype
    assert jnp.allclose(out, ref, atol=1e-6), "mismatch vs reference"
    print("KERNEL_OK")
</pallas_src>

<mosaic_0001>
module attributes {stable_mosaic.version = 11 : i64} {
  func.func @_yuv420_to_444_kernel(%arg0: i32, %arg1: i32, %arg2: memref<1x6x8x16xf32, #tpu.memory_space<vmem>>, %arg3: memref<16x32xf32, #tpu.memory_space<vmem>>, %arg4: memref<16x32xf32, #tpu.memory_space<vmem>>, %arg5: memref<16x32xf32, #tpu.memory_space<vmem>>, %arg6: memref<1x3x8x64xf32, #tpu.memory_space<vmem>>) attributes {dimension_semantics = [#tpu.dimension_semantics<parallel>, #tpu.dimension_semantics<parallel>], iteration_bounds = array<i64: 2, 3>, scalar_prefetch = 0 : i64, scratch_operands = 0 : i64, tpu.core_type = #tpu.core_type<tc>, window_params = [{transform_indices = @transform_0, window_bounds = array<i64: 1, 6, 8, 16>}, {pipeline_mode = #tpu.pipeline_mode<synchronous>, transform_indices = @transform_1, window_bounds = array<i64: 16, 32>}, {pipeline_mode = #tpu.pipeline_mode<synchronous>, transform_indices = @transform_2, window_bounds = array<i64: 16, 32>}, {pipeline_mode = #tpu.pipeline_mode<synchronous>, transform_indices = @transform_3, window_bounds = array<i64: 16, 32>}, {transform_indices = @transform_4, window_bounds = array<i64: 1, 3, 8, 64>}]} {
    %c0 = arith.constant 0 : index
    %c0_0 = arith.constant 0 : index
    %0 = vector.load %arg3[%c0, %c0_0] : memref<16x32xf32, #tpu.memory_space<vmem>>, vector<16x32xf32>
    %c0_1 = arith.constant 0 : index
    %c0_2 = arith.constant 0 : index
    %1 = vector.load %arg4[%c0_1, %c0_2] : memref<16x32xf32, #tpu.memory_space<vmem>>, vector<16x32xf32>
    %c0_3 = arith.constant 0 : index
    %c0_4 = arith.constant 0 : index
    %2 = vector.load %arg5[%c0_3, %c0_4] : memref<16x32xf32, #tpu.memory_space<vmem>>, vector<16x32xf32>
    %c0_5 = arith.constant 0 : index
    %c0_6 = arith.constant 0 : index
    %c0_7 = arith.constant 0 : index
    %c0_8 = arith.constant 0 : index
    %3 = vector.load %arg2[%c0_5, %c0_6, %c0_7, %c0_8] : memref<1x6x8x16xf32, #tpu.memory_space<vmem>>, vector<1x1x8x16xf32>
    %4 = vector.shape_cast %3 : vector<1x1x8x16xf32> to vector<8x16xf32>
    %c0_9 = arith.constant 0 : index
    %c1 = arith.constant 1 : index
    %c0_10 = arith.constant 0 : index
    %c0_11 = arith.constant 0 : index
    %5 = vector.load %arg2[%c0_9, %c1, %c0_10, %c0_11] : memref<1x6x8x16xf32, #tpu.memory_space<vmem>>, vector<1x1x8x16xf32>
    %6 = vector.shape_cast %5 : vector<1x1x8x16xf32> to vector<8x16xf32>
    %c0_12 = arith.constant 0 : index
    %c2 = arith.constant 2 : index
    %c0_13 = arith.constant 0 : index
    %c0_14 = arith.constant 0 : index
    %7 = vector.load %arg2[%c0_12, %c2, %c0_13, %c0_14] : memref<1x6x8x16xf32, #tpu.memory_space<vmem>>, vector<1x1x8x16xf32>
    %8 = vector.shape_cast %7 : vector<1x1x8x16xf32> to vector<8x16xf32>
    %c0_15 = arith.constant 0 : index
    %c3 = arith.constant 3 : index
    %c0_16 = arith.constant 0 : index
    %c0_17 = arith.constant 0 : index
    %9 = vector.load %arg2[%c0_15, %c3, %c0_16, %c0_17] : memref<1x6x8x16xf32, #tpu.memory_space<vmem>>, vector<1x1x8x16xf32>
    %10 = vector.shape_cast %9 : vector<1x1x8x16xf32> to vector<8x16xf32>
    %c0_18 = arith.constant 0 : index
    %c4 = arith.constant 4 : index
    %c0_19 = arith.constant 0 : index
    %c0_20 = arith.constant 0 : index
    %11 = vector.load %arg2[%c0_18, %c4, %c0_19, %c0_20] : memref<1x6x8x16xf32, #tpu.memory_space<vmem>>, vector<1x1x8x16xf32>
    %12 = vector.shape_cast %11 : vector<1x1x8x16xf32> to vector<8x16xf32>
    %c0_21 = arith.constant 0 : index
    %c5 = arith.constant 5 : index
    %c0_22 = arith.constant 0 : index
    %c0_23 = arith.constant 0 : index
    %13 = vector.load %arg2[%c0_21, %c5, %c0_22, %c0_23] : memref<1x6x8x16xf32, #tpu.memory_space<vmem>>, vector<1x1x8x16xf32>
    %14 = vector.shape_cast %13 : vector<1x1x8x16xf32> to vector<8x16xf32>
    %cst = arith.constant dense<0.000000e+00> : vector<8x32xf32>
    %15 = tpu.matmul %4, %0, %cst {dimension_numbers = #tpu.dot_dimension_numbers<[1], [0], [0], [1], [0, 0, 1, 1], [], []>} : vector<8x16xf32>, vector<16x32xf32>, vector<8x32xf32> -> vector<8x32xf32>
    %cst_24 = arith.constant dense<0.000000e+00> : vector<8x32xf32>
    %16 = tpu.matmul %6, %1, %cst_24 {dimension_numbers = #tpu.dot_dimension_numbers<[1], [0], [0], [1], [0, 0, 1, 1], [], []>} : vector<8x16xf32>, vector<16x32xf32>, vector<8x32xf32> -> vector<8x32xf32>
    %17 = arith.addf %15, %16 : vector<8x32xf32>
    %c0_25 = arith.constant 0 : index
    %c0_26 = arith.constant 0 : index
    %c0_27 = arith.constant 0 : index
    %c0_28 = arith.constant 0 : index
    %18 = vector.load %arg6[%c0_25, %c0_26, %c0_27, %c0_28] : memref<1x3x8x64xf32, #tpu.memory_space<vmem>>, vector<1x1x8x32xf32>
    %19 = vector.shape_cast %18 : vector<1x1x8x32xf32> to vector<8x32xf32>
    %20 = vector.shape_cast %17 : vector<8x32xf32> to vector<1x1x8x32xf32>
    tpu.vector_store %arg6[%c0_25, %c0_26, %c0_27, %c0_28], %20 {strides = array<i32>} : memref<1x3x8x64xf32, #tpu.memory_space<vmem>>, vector<1x1x8x32xf32>,
    %cst_29 = arith.constant dense<0.000000e+00> : vector<8x32xf32>
    %21 = tpu.matmul %8, %0, %cst_29 {dimension_numbers = #tpu.dot_dimension_numbers<[1], [0], [0], [1], [0, 0, 1, 1], [], []>} : vector<8x16xf32>, vector<16x32xf32>, vector<8x32xf32> -> vector<8x32xf32>
    %cst_30 = arith.constant dense<0.000000e+00> : vector<8x32xf32>
    %22 = tpu.matmul %10, %1, %cst_30 {dimension_numbers = #tpu.dot_dimension_numbers<[1], [0], [0], [1], [0, 0, 1, 1], [], []>} : vector<8x16xf32>, vector<16x32xf32>, vector<8x32xf32> -> vector<8x32xf32>
    %23 = arith.addf %21, %22 : vector<8x32xf32>
    %c0_31 = arith.constant 0 : index
    %c0_32 = arith.constant 0 : index
    %c0_33 = arith.constant 0 : index
    %c32 = arith.constant 32 : index
    %24 = vector.load %arg6[%c0_31, %c0_32, %c0_33, %c32] : memref<1x3x8x64xf32, #tpu.memory_space<vmem>>, vector<1x1x8x32xf32>
    %25 = vector.shape_cast %24 : vector<1x1x8x32xf32> to vector<8x32xf32>
    %26 = vector.shape_cast %23 : vector<8x32xf32> to vector<1x1x8x32xf32>
    tpu.vector_store %arg6[%c0_31, %c0_32, %c0_33, %c32], %26 {strides = array<i32>} : memref<1x3x8x64xf32, #tpu.memory_space<vmem>>, vector<1x1x8x32xf32>,
    %cst_34 = arith.constant dense<0.000000e+00> : vector<8x32xf32>
    %27 = tpu.matmul %12, %2, %cst_34 {dimension_numbers = #tpu.dot_dimension_numbers<[1], [0], [0], [1], [0, 0, 1, 1], [], []>} : vector<8x16xf32>, vector<16x32xf32>, vector<8x32xf32> -> vector<8x32xf32>
    %c0_35 = arith.constant 0 : index
    %c1_36 = arith.constant 1 : index
    %c0_37 = arith.constant 0 : index
    %c0_38 = arith.constant 0 : index
    %28 = vector.load %arg6[%c0_35, %c1_36, %c0_37, %c0_38] : memref<1x3x8x64xf32, #tpu.memory_space<vmem>>, vector<1x1x8x32xf32>
    %29 = vector.shape_cast %28 : vector<1x1x8x32xf32> to vector<8x32xf32>
    %30 = vector.shape_cast %27 : vector<8x32xf32> to vector<1x1x8x32xf32>
    tpu.vector_store %arg6[%c0_35, %c1_36, %c0_37, %c0_38], %30 {strides = array<i32>} : memref<1x3x8x64xf32, #tpu.memory_space<vmem>>, vector<1x1x8x32xf32>,
    %c0_39 = arith.constant 0 : index
    %c1_40 = arith.constant 1 : index
    %c0_41 = arith.constant 0 : index
    %c32_42 = arith.constant 32 : index
    %31 = vector.load %arg6[%c0_39, %c1_40, %c0_41, %c32_42] : memref<1x3x8x64xf32, #tpu.memory_space<vmem>>, vector<1x1x8x32xf32>
    %32 = vector.shape_cast %31 : vector<1x1x8x32xf32> to vector<8x32xf32>
    %33 = vector.shape_cast %27 : vector<8x32xf32> to vector<1x1x8x32xf32>
    tpu.vector_store %arg6[%c0_39, %c1_40, %c0_41, %c32_42], %33 {strides = array<i32>} : memref<1x3x8x64xf32, #tpu.memory_space<vmem>>, vector<1x1x8x32xf32>,
    %cst_43 = arith.constant dense<0.000000e+00> : vector<8x32xf32>
    %34 = tpu.matmul %14, %2, %cst_43 {dimension_numbers = #tpu.dot_dimension_numbers<[1], [0], [0], [1], [0, 0, 1, 1], [], []>} : vector<8x16xf32>, vector<16x32xf32>, vector<8x32xf32> -> vector<8x32xf32>
    %c0_44 = arith.constant 0 : index
    %c2_45 = arith.constant 2 : index
    %c0_46 = arith.constant 0 : index
    %c0_47 = arith.constant 0 : index
    %35 = vector.load %arg6[%c0_44, %c2_45, %c0_46, %c0_47] : memref<1x3x8x64xf32, #tpu.memory_space<vmem>>, vector<1x1x8x32xf32>
    %36 = vector.shape_cast %35 : vector<1x1x8x32xf32> to vector<8x32xf32>
    %37 = vector.shape_cast %34 : vector<8x32xf32> to vector<1x1x8x32xf32>
    tpu.vector_store %arg6[%c0_44, %c2_45, %c0_46, %c0_47], %37 {strides = array<i32>} : memref<1x3x8x64xf32, #tpu.memory_space<vmem>>, vector<1x1x8x32xf32>,
    %c0_48 = arith.constant 0 : index
    %c2_49 = arith.constant 2 : index
    %c0_50 = arith.constant 0 : index
    %c32_51 = arith.constant 32 : index
    %38 = vector.load %arg6[%c0_48, %c2_49, %c0_50, %c32_51] : memref<1x3x8x64xf32, #tpu.memory_space<vmem>>, vector<1x1x8x32xf32>
    %39 = vector.shape_cast %38 : vector<1x1x8x32xf32> to vector<8x32xf32>
    %40 = vector.shape_cast %34 : vector<8x32xf32> to vector<1x1x8x32xf32>
    tpu.vector_store %arg6[%c0_48, %c2_49, %c0_50, %c32_51], %40 {strides = array<i32>} : memref<1x3x8x64xf32, #tpu.memory_space<vmem>>, vector<1x1x8x32xf32>,
    return
  }
  func.func @transform_0(%arg0: i32, %arg1: i32) -> (i32, i32, i32, i32) {
    %c0_i32 = arith.constant 0 : i32
    %c0_i32_0 = arith.constant 0 : i32
    %c0_i32_1 = arith.constant 0 : i32
    return %arg0, %c0_i32, %arg1, %c0_i32_0 : i32, i32, i32, i32
  }
  func.func @transform_1(%arg0: i32, %arg1: i32) -> (i32, i32) {
    %c0_i32 = arith.constant 0 : i32
    %c0_i32_0 = arith.constant 0 : i32
    %c0_i32_1 = arith.constant 0 : i32
    return %c0_i32, %c0_i32_0 : i32, i32
  }
  func.func @transform_2(%arg0: i32, %arg1: i32) -> (i32, i32) {
    %c0_i32 = arith.constant 0 : i32
    %c0_i32_0 = arith.constant 0 : i32
    %c0_i32_1 = arith.constant 0 : i32
    return %c0_i32, %c0_i32_0 : i32, i32
  }
  func.func @transform_3(%arg0: i32, %arg1: i32) -> (i32, i32) {
    %c0_i32 = arith.constant 0 : i32
    %c0_i32_0 = arith.constant 0 : i32
    %c0_i32_1 = arith.constant 0 : i32
    return %c0_i32, %c0_i32_0 : i32, i32
  }
  func.func @transform_4(%arg0: i32, %arg1: i32) -> (i32, i32, i32, i32) {
    %c0_i32 = arith.constant 0 : i32
    %c0_i32_0 = arith.constant 0 : i32
    %c0_i32_1 = arith.constant 0 : i32
    return %arg0, %c0_i32, %arg1, %c0_i32_0 : i32, i32, i32, i32
  }
}

</mosaic_0001>

<llo_original>
// kernel: tpu_custom_call.1
$region0: #{tpu_custom_call.1}
  #allocation0 [shape = 'u32[]', space=smem, size = 0x4, offset = 0x4, fixed_abs, tag = 'smem constant byte address 0x4 - core index']
  #allocation1 [shape = 'u32[144,128]{1,0:T(1,128)}', space=vmem, size = 0x12000, scoped, tag = 'internal scratch']
  %s0 = inlined_call_operand.vmem [shape: f32[2,6,24,16], index: 0, kind: input, shape index: {}]
  %s1 = inlined_call_operand.vmem [shape: f32[16,32], index: 1, kind: input, shape index: {}]
  %s2 = inlined_call_operand.vmem [shape: f32[16,32], index: 2, kind: input, shape index: {}]
  %s3 = inlined_call_operand.vmem [shape: f32[16,32], index: 3, kind: input, shape index: {}]
  %s4 = inlined_call_operand.hbm [shape: f32[2,3,24,64], index: 4, kind: output, shape index: {}]
  %s5 = sld [smem:[#allocation0]]
  $region87: #{tpu_custom_call.1} parent=0
    _
  %s7 = ssub.s32 1, %s5
  %s8 = scalar_select 0, %s7, %s5
  $region1: #{tpu_custom_call.1} parent=0
    #allocation2 [shape = 'u8[49152]{0}', space=vmem, size = 0xc000, scoped, tag = 'input window, operand 0']
    #allocation3 [shape = 'u8[24576]{0}', space=vmem, size = 0x6000, scoped, tag = 'output window, operand 0']
    #allocation4 [shape = 's32[2]{0}', space=sflag, size = 0x8, scoped, tag = 'scoped memory for tpu_custom_call.1']
    %9 = vsyncpa [#allocation4], 0
    %s10 = scalar_lea.sflag [#allocation4], 1
    %11 = vsyncpa %s10, 0
    loop: start=0, step=1, limit=8
    $region2: #{tpu_custom_call.1} parent=1 // loop_pre_header
      _
    $region3: #{tpu_custom_call.1} parent=1 // loop_header
      %s13 = sphi 0, %s17
      %p14 = scmp.ge.s32.totalorder %s13, 8
      %s20 = sphi 0, %s32
      %s21 = sphi 0, %s28
      %s22 = sphi 0, %s20
      %s23 = sphi 0, %s21
      %s24 = sphi 0, %s22
      %s25 = sphi 0, %s23
      %s37 = sphi 0, %s39
      %s40 = sphi 0, %s37
      %s41 = sphi 0, %s40
      %s57 = sphi 0, %s41
      %s61 = sphi 0, %s61
      %s63 = sphi 0, %s61
      %s64 = sphi 0, %s63
      %s78 = sphi 0, %s64
      %s82 = sphi 0, %s82
      %s84 = sphi 0, %s82
      %s85 = sphi 0, %s84
      %s99 = sphi 0, %s85
      %s103 = sphi 0, %s103
      %s105 = sphi 0, %s103
      %s106 = sphi 0, %s105
      %s120 = sphi 0, %s106
      %s128 = sphi 0, %s130
      %s131 = sphi 0, %s128
      %s132 = sphi 0, %s131
      %s148 = sphi 0, %s132
    $region4: #{tpu_custom_call.1} parent=1 // loop_header_branch
      %16 = sbr.rel (%p14) target = $region8
    $region5: #{tpu_custom_call.1} parent=1 // loop_body
      %s18 = ssub.s32 %s13, 1
      %s19 = ssub.s32 %s13, 2
      %s26 = sadd.s32 1, %s21
      %p27 = scmp.ge.s32.totalorder %s26, 3
      %s28 = scalar_select %p27, 0, %s26
      %s29 = sadd.s32 1, %s20
      %s30 = scalar_select %p27, %s29, %s20
      %p31 = scmp.ge.s32.totalorder %s30, 2
      %s32 = scalar_select %p31, 0, %s30
      %s33 = ssub.s32 %s20, %s32
      %s34 = ssub.s32 %s21, %s28
      %s35 = sor.u32 %s33, %s34
      %p36 = scmp.eq.s32.totalorder %s35, 0
      %s38 = sadd.s32 %s37, 1
      %s39 = scalar_select %p36, %s37, %s38
      %p42 = pneg %p36
      %p43 = scmp.eq.s32.totalorder %s13, 5
      %p44 = por %p42, %p43
      %p45 = scmp.ne.s32.totalorder %s37, %s40
      %p46 = scmp.eq.s32.totalorder %s13, 0
      %p47 = por %p45, %p46
      %p48 = scmp.ne.s32.totalorder %s37, %s40
      %p49 = scmp.eq.s32.totalorder %s18, 5
      %p50 = por %p48, %p49
      %p51 = scmp.ne.s32.totalorder %s40, %s41
      %p52 = scmp.eq.s32.totalorder %s18, 0
      %p53 = por %p51, %p52
      %p54 = scmp.ne.s32.totalorder %s40, %s41
      %p55 = scmp.eq.s32.totalorder %s19, 5
      %p56 = por %p54, %p55
      %p58 = scmp.ne.s32.totalorder %s41, %s57
      %p59 = scmp.eq.s32.totalorder %s19, 0
      %p60 = por %p58, %p59
      %s62 = sadd.s32 %s61, 1
      %p65 = scmp.eq.s32.totalorder %s13, 5
      %p66 = scmp.ne.s32.totalorder %s61, %s63
      %p67 = scmp.eq.s32.totalorder %s13, 0
      %p68 = por %p66, %p67
      %p69 = scmp.ne.s32.totalorder %s61, %s63
      %p70 = scmp.eq.s32.totalorder %s18, 5
      %p71 = por %p69, %p70
      %p72 = scmp.ne.s32.totalorder %s63, %s64
      %p73 = scmp.eq.s32.totalorder %s18, 0
      %p74 = por %p72, %p73
      %p75 = scmp.ne.s32.totalorder %s63, %s64
      %p76 = scmp.eq.s32.totalorder %s19, 5
      %p77 = por %p75, %p76
      %p79 = scmp.ne.s32.totalorder %s64, %s78
      %p80 = scmp.eq.s32.totalorder %s19, 0
      %p81 = por %p79, %p80
      %s83 = sadd.s32 %s82, 1
      %p86 = scmp.eq.s32.totalorder %s13, 5
      %p87 = scmp.ne.s32.totalorder %s82, %s84
      %p88 = scmp.eq.s32.totalorder %s13, 0
      %p89 = por %p87, %p88
      %p90 = scmp.ne.s32.totalorder %s82, %s84
      %p91 = scmp.eq.s32.totalorder %s18, 5
      %p92 = por %p90, %p91
      %p93 = scmp.ne.s32.totalorder %s84, %s85
      %p94 = scmp.eq.s32.totalorder %s18, 0
      %p95 = por %p93, %p94
      %p96 = scmp.ne.s32.totalorder %s84, %s85
      %p97 = scmp.eq.s32.totalorder %s19, 5
      %p98 = por %p96, %p97
      %p100 = scmp.ne.s32.totalorder %s85, %s99
      %p101 = scmp.eq.s32.totalorder %s19, 0
      %p102 = por %p100, %p101
      %s104 = sadd.s32 %s103, 1
      %p107 = scmp.eq.s32.totalorder %s13, 5
      %p108 = scmp.ne.s32.totalorder %s103, %s105
      %p109 = scmp.eq.s32.totalorder %s13, 0
      %p110 = por %p108, %p109
      %p111 = scmp.ne.s32.totalorder %s103, %s105
      %p112 = scmp.eq.s32.totalorder %s18, 5
      %p113 = por %p111, %p112
      %p114 = scmp.ne.s32.totalorder %s105, %s106
      %p115 = scmp.eq.s32.totalorder %s18, 0
      %p116 = por %p114, %p115
      %p117 = scmp.ne.s32.totalorder %s105, %s106
      %p118 = scmp.eq.s32.totalorder %s19, 5
      %p119 = por %p117, %p118
      %p121 = scmp.ne.s32.totalorder %s106, %s120
      %p122 = scmp.eq.s32.totalorder %s19, 0
      %p123 = por %p121, %p122
      %s124 = ssub.s32 %s20, %s32
      %s125 = ssub.s32 %s21, %s28
      %s126 = sor.u32 %s124, %s125
      %p127 = scmp.eq.s32.totalorder %s126, 0
      %s129 = sadd.s32 %s128, 1
      %s130 = scalar_select %p127, %s128, %s129
      %p133 = pneg %p127
      %p134 = scmp.eq.s32.totalorder %s13, 5
      %p135 = por %p133, %p134
      %p136 = scmp.ne.s32.totalorder %s128, %s131
      %p137 = scmp.eq.s32.totalorder %s13, 0
      %p138 = por %p136, %p137
      %p139 = scmp.ne.s32.totalorder %s128, %s131
      %p140 = scmp.eq.s32.totalorder %s18, 5
      %p141 = por %p139, %p140
      %p142 = scmp.ne.s32.totalorder %s131, %s132
      %p143 = scmp.eq.s32.totalorder %s18, 0
      %p144 = por %p142, %p143
      %p145 = scmp.ne.s32.totalorder %s131, %s132
      %p146 = scmp.eq.s32.totalorder %s19, 5
      %p147 = por %p145, %p146
      %p149 = scmp.ne.s32.totalorder %s132, %s148
      %p150 = scmp.eq.s32.totalorder %s19, 0
      %p151 = por %p149, %p150
      %p152 = scmp.le.s32.totalorder 1, %s13
      %p153 = scmp.lt.s32.totalorder %s13, 7
      %p154 = pnand %p152, %p153
      %p155 = pneg %p154
      // Predicated region
      $region9: #{tpu_custom_call.1} parent=5 // pred_check
        _
      $region10: #{tpu_custom_call.1} parent=5 // pred_check_branch
        %157 = sbr.rel (%p154) target = $region12
      $region11: #{tpu_custom_call.1} parent=5 // pred_region
        %s158 = ssub.s32 %s13, 1
        // Predicated region
        $region13: #{tpu_custom_call.1} parent=11 // pred_check
          %p159 = pneg %p74
        $region14: #{tpu_custom_call.1} parent=11 // pred_check_branch
          %161 = sbr.rel (%p159) target = $region16
        $region15: #{tpu_custom_call.1} parent=11 // pred_region
          _
        $region16: #{tpu_custom_call.1} parent=11 // pred_fallthru
          _
        // Predicated region
        $region17: #{tpu_custom_call.1} parent=11 // pred_check
          %p162 = pneg %p95
        $region18: #{tpu_custom_call.1} parent=11 // pred_check_branch
          %164 = sbr.rel (%p162) target = $region20
        $region19: #{tpu_custom_call.1} parent=11 // pred_region
          _
        $region20: #{tpu_custom_call.1} parent=11 // pred_fallthru
          _
        // Predicated region
        $region21: #{tpu_custom_call.1} parent=11 // pred_check
          %p165 = pneg %p116
        $region22: #{tpu_custom_call.1} parent=11 // pred_check_branch
          %167 = sbr.rel (%p165) target = $region24
        $region23: #{tpu_custom_call.1} parent=11 // pred_region
          _
        $region24: #{tpu_custom_call.1} parent=11 // pred_fallthru
          _
      $region12: #{tpu_custom_call.1} parent=5 // pred_fallthru
        _
      %p168 = scmp.lt.s32.totalorder %s13, 6
      // Predicated region
      $region25: #{tpu_custom_call.1} parent=5 // pred_check
        %p169 = pneg %p168
      $region26: #{tpu_custom_call.1} parent=5 // pred_check_branch
        %171 = sbr.rel (%p169) target = $region28
      $region27: #{tpu_custom_call.1} parent=5 // pred_region
        // Predicated region
        $region29: #{tpu_custom_call.1} parent=27 // pred_check
          %p172 = pneg %p47
        $region30: #{tpu_custom_call.1} parent=27 // pred_check_branch
          %174 = sbr.rel (%p172) target = $region32
        $region31: #{tpu_custom_call.1} parent=27 // pred_region
          %s175 = sand.u32 %s37, 1
          %s176 = sand.u32 %s37, 1
          %s177 = smul.addr %s176, 48
          %s178 = scalar_lea.vmem [#allocation2], %s177
          %s179 = smul.addr %s20, 18
          %s180 = sadd.s32 %s21, %s179
          %s181 = smul.addr %s180, 8
          %s182 = scalar_lea.vmem %s0, %s181
          // Predicated region
          $region33: #{tpu_custom_call.1} parent=31 // pred_check
            _
          $region34: #{tpu_custom_call.1} parent=31 // pred_check_branch
            %184 = sbr.rel (0) target = $region36
          $region35: #{tpu_custom_call.1} parent=31 // pred_region
            // Predicated region
            $region37: #{tpu_custom_call.1} parent=35 // pred_check
              _
            $region38: #{tpu_custom_call.1} parent=35 // pred_check_branch
              %186 = sbr.rel (0) target = $region40
            $region39: #{tpu_custom_call.1} parent=35 // pred_region
              // Predicated region
              $region52: #{tpu_custom_call.1} parent=39 // pred_check
                _
              $region53: #{tpu_custom_call.1} parent=39 // pred_check_branch
                %211 = sbr.rel (0) target = $region55
              $region54: #{tpu_custom_call.1} parent=39 // pred_region
                loop: start=0, step=1, limit=1
                $region56: #{tpu_custom_call.1} parent=54 // loop_pre_header
                  _
                $region57: #{tpu_custom_call.1} parent=54 // loop_header
                  %s213 = sphi 0, %s217
                  %p214 = scmp.ge.s32.totalorder %s213, 1
                  %s218 = sphi %s182, %s182
                  %s219 = sphi %s178, %s178
                $region58: #{tpu_custom_call.1} parent=54 // loop_header_branch
                  %216 = sbr.rel (%p214) target = $region62
                $region59: #{tpu_custom_call.1} parent=54 // loop_body
                  %v220 = vld [vmem:[%s218] sm:$0xff]
                  %221 = vst [vmem:[%s219] sm:$0xff] %v220
                  %v222 = vld [vmem:[%s218 + $0x18] sm:$0xff]
                  %223 = vst [vmem:[%s219 + $0x8] sm:$0xff] %v222
                  %v224 = vld [vmem:[%s218 + $0x30] sm:$0xff]
                  %225 = vst [vmem:[%s219 + $0x10] sm:$0xff] %v224
                  %v226 = vld [vmem:[%s218 + $0x48] sm:$0xff]
                  %227 = vst [vmem:[%s219 + $0x18] sm:$0xff] %v226
                  %v228 = vld [vmem:[%s218 + $0x60] sm:$0xff]
                  %229 = vst [vmem:[%s219 + $0x20] sm:$0xff] %v228
                  %v230 = vld [vmem:[%s218 + $0x78] sm:$0xff]
                  %231 = vst [vmem:[%s219 + $0x28] sm:$0xff] %v230
                $region60: #{tpu_custom_call.1} parent=54 // loop_footer
                  %s217 = sadd.s32 1, %s213
                $region61: #{tpu_custom_call.1} parent=54 // loop_footer_branch
                  %212 = sbr.rel target = $region57
                $region62: #{tpu_custom_call.1} parent=54 // loop_exit
                  _
              $region55: #{tpu_custom_call.1} parent=39 // pred_fallthru
                _
              // Predicated region
              $region63: #{tpu_custom_call.1} parent=39 // pred_check
                _
              $region64: #{tpu_custom_call.1} parent=39 // pred_check_branch
                %233 = sbr.rel target = $region66
              $region65: #{tpu_custom_call.1} parent=39 // pred_region
                _
              $region66: #{tpu_custom_call.1} parent=39 // pred_fallthru
                _
            $region40: #{tpu_custom_call.1} parent=35 // pred_fallthru
              _
            // Predicated region
            $region41: #{tpu_custom_call.1} parent=35 // pred_check
              _
            $region42: #{tpu_custom_call.1} parent=35 // pred_check_branch
              %188 = sbr.rel target = $region44
            $region43: #{tpu_custom_call.1} parent=35 // pred_region
              loop: start=0, step=1, limit=1
              $region45: #{tpu_custom_call.1} parent=43 // loop_pre_header
                _
              $region46: #{tpu_custom_call.1} parent=43 // loop_header
                %s191 = sphi 0, %s195
                %p192 = scmp.ge.s32.totalorder %s191, 1
                %s196 = sphi %s182, %s182
                %s197 = sphi %s178, %s178
              $region47: #{tpu_custom_call.1} parent=43 // loop_header_branch
                %194 = sbr.rel (%p192) target = $region51
              $region48: #{tpu_custom_call.1} parent=43 // loop_body
                %v198 = vld [vmem:[%s196] sm:$0xff]
                %199 = vst [vmem:[%s197] sm:$0xff] %v198
                %v200 = vld [vmem:[%s196 + $0x18] sm:$0xff]
                %201 = vst [vmem:[%s197 + $0x8] sm:$0xff] %v200
                %v202 = vld [vmem:[%s196 + $0x30] sm:$0xff]
                %203 = vst [vmem:[%s197 + $0x10] sm:$0xff] %v202
                %v204 = vld [vmem:[%s196 + $0x48] sm:$0xff]
                %205 = vst [vmem:[%s197 + $0x18] sm:$0xff] %v204
                %v206 = vld [vmem:[%s196 + $0x60] sm:$0xff]
                %207 = vst [vmem:[%s197 + $0x20] sm:$0xff] %v206
                %v208 = vld [vmem:[%s196 + $0x78] sm:$0xff]
                %209 = vst [vmem:[%s197 + $0x28] sm:$0xff] %v208
              $region49: #{tpu_custom_call.1} parent=43 // loop_footer
                %s195 = sadd.s32 1, %s191
              $region50: #{tpu_custom_call.1} parent=43 // loop_footer_branch
                %190 = sbr.rel target = $region46
              $region51: #{tpu_custom_call.1} parent=43 // loop_exit
                _
            $region44: #{tpu_custom_call.1} parent=35 // pred_fallthru
              _
          $region36: #{tpu_custom_call.1} parent=31 // pred_fallthru
            _
          %234 = vnop
        $region32: #{tpu_custom_call.1} parent=27 // pred_fallthru
          _
      $region28: #{tpu_custom_call.1} parent=5 // pred_fallthru
        _
      %p235 = scmp.le.s32.totalorder 1, %s13
      %p236 = scmp.lt.s32.totalorder %s13, 7
      %p237 = pnand %p235, %p236
      %p238 = pneg %p237
      // Predicated region
      $region67: #{tpu_custom_call.1} parent=5 // pred_check
        _
      $region68: #{tpu_custom_call.1} parent=5 // pred_check_branch
        %240 = sbr.rel (%p237) target = $region70
      $region69: #{tpu_custom_call.1} parent=5 // pred_region
        %s241 = ssub.s32 %s13, 1
        %s242 = sand.u32 %s40, 1
        %s243 = sand.u32 %s40, 1
        %s244 = smul.addr %s243, 48
        %s245 = scalar_lea.vmem [#allocation2], %s244
        // Predicated region
        $region71: #{tpu_custom_call.1} parent=69 // pred_check
          %p246 = pneg %p53
        $region72: #{tpu_custom_call.1} parent=69 // pred_check_branch
          %248 = sbr.rel (%p246) target = $region74
        $region73: #{tpu_custom_call.1} parent=69 // pred_region
          _
        $region74: #{tpu_custom_call.1} parent=69 // pred_fallthru
          _
        %s249 = sand.u32 %s40, 1
        %s250 = sand.u32 %s40, 1
        %s251 = smul.addr %s250, 48
        %s252 = scalar_lea.vmem [#allocation2], %s251
        %p253 = pneg %p53
        %p254 = pneg %p50
        %p255 = pneg %p74
        %p256 = pneg %p71
        %p257 = pneg %p95
        %p258 = pneg %p92
        %p259 = pneg %p116
        %p260 = pneg %p113
        %p261 = pneg %p144
        %p262 = pneg %p141
        %s263 = sand.u32 %s131, 1
        %s264 = scalar_lea.sflag [#allocation4], %s263
        %s265 = sand.u32 %s131, 1
        %s266 = smul.addr %s265, 24
        %s267 = scalar_lea.vmem [#allocation3], %s266
        %v268 = vld [vmem:[%s1] sm:$0xff]
        %v269 = vld [vmem:[%s1 + $0x8] sm:$0xff]
        %v270 = vld [vmem:[%s2] sm:$0xff]
        %v271 = vld [vmem:[%s2 + $0x8] sm:$0xff]
        %v272 = vld [vmem:[%s3] sm:$0xff]
        %v273 = vld [vmem:[%s3 + $0x8] sm:$0xff]
        %v274 = vld [vmem:[%s245] sm:$0xff]
        %s275 = scalar_lea.vmem %s245, 8 [#allocation2]
        %v276 = vld [vmem:[%s275] sm:$0xff]
        %s277 = scalar_lea.vmem %s245, 16 [#allocation2]
        %v278 = vld [vmem:[%s277] sm:$0xff]
        %s279 = scalar_lea.vmem %s245, 24 [#allocation2]
        %v280 = vld [vmem:[%s279] sm:$0xff]
        %s281 = scalar_lea.vmem %s245, 32 [#allocation2]
        %v282 = vld [vmem:[%s281] sm:$0xff]
        %s283 = scalar_lea.vmem %s245, 40 [#allocation2]
        %v284 = vld [vmem:[%s283] sm:$0xff]
        %vm285 = vcmask 130048
        %v287 = vsel %vm285, %v276, 0
        %289 = vmatprep.subr.mxu0 0.0
        %290 = vmatpush1.msra.mxu0 %v270
        %291 = vmatprep.subr.mxu0 0.0
        %292 = vmatpush1.msra.mxu0 %v271
        %293 = vmatprep.subr.mxu0 0.0
        %294 = vmatpush1.msra.mxu0 0.0
        %295 = vmatprep.subr.mxu0 0.0
        %296 = vmatpush1.msra.mxu0 0.0
        %297 = vmatprep.subr.mxu0 0.0
        %298 = vmatpush1.msra.mxu0 0.0
        %299 = vmatprep.subr.mxu0 0.0
        %300 = vmatpush1.msra.mxu0 0.0
        %301 = vmatprep.subr.mxu0 0.0
        %302 = vmatpush1.msra.mxu0 0.0
        %303 = vmatprep.subr.mxu0 0.0
        %304 = vmatpush1.msra.mxu0 0.0
        %305 = vmatprep.subr.mxu0 0.0
        %306 = vmatpush1.msra.mxu0 0.0
        %307 = vmatprep.subr.mxu0 0.0
        %308 = vmatpush1.msra.mxu0 0.0
        %309 = vmatprep.subr.mxu0 0.0
        %310 = vmatpush1.msra.mxu0 0.0
        %311 = vmatprep.subr.mxu0 0.0
        %312 = vmatpush1.msra.mxu0 0.0
        %313 = vmatprep.subr.mxu0 0.0
        %314 = vmatpush1.msra.mxu0 0.0
        %315 = vmatprep.subr.mxu0 0.0
        %316 = vmatpush1.msra.mxu0 0.0
        %317 = vmatprep.subr.mxu0 0.0
        %318 = vmatpush1.msra.mxu0 0.0
        %319 = vmatprep.subr.mxu0 0.0
        %320 = vmatpush1.msra.mxu0 0.0
        %321 = vmatprep.subr.mxu0 0.0
        %322 = vmatpush1.msra.mxu0 0.0
        %323 = vmatprep.subr.mxu0 0.0
        %324 = vmatpush1.msra.mxu0 0.0
        %325 = vmatprep.subr.mxu0 0.0
        %326 = vmatpush1.msra.mxu0 0.0
        %327 = vmatprep.subr.mxu0 0.0
        %328 = vmatpush1.msra.mxu0 0.0
        %329 = vmatprep.subr.mxu0 0.0
        %330 = vmatpush1.msra.mxu0 0.0
        %331 = vmatprep.subr.mxu0 0.0
        %332 = vmatpush1.msra.mxu0 0.0
        %333 = vmatprep.subr.mxu0 0.0
        %334 = vmatpush1.msra.mxu0 0.0
        %335 = vmatprep.subr.mxu0 0.0
        %336 = vmatpush1.msra.mxu0 0.0
        %337 = vmatprep.subr.mxu0 0.0
        %338 = vmatpush1.msra.mxu0 0.0
        %339 = vmatprep.subr.mxu0 0.0
        %340 = vmatpush1.msra.mxu0 0.0
        %341 = vmatprep.subr.mxu0 0.0
        %342 = vmatpush1.msra.mxu0 0.0
        %343 = vmatprep.subr.mxu0 0.0
        %344 = vmatpush1.msra.mxu0 0.0
        %345 = vmatprep.subr.mxu0 0.0
        %346 = vmatpush1.msra.mxu0 0.0
        %347 = vmatprep.subr.mxu0 0.0
        %348 = vmatpush1.msra.mxu0 0.0
        %349 = vmatprep.subr.mxu0 0.0
        %350 = vmatpush1.msra.mxu0 0.0
        %351 = vmatprep.subr.mxu0 0.0
        %352 = vmatpush1.msra.mxu0 0.0
        %353 = vmatprep.mubr.f32.mxu0 0.0
        %354 = vmatmul.mubr.f32.gmra.mrb[0].mxu0 %v287
        %v355 = vpop.f32.mrb[0].mxu0
        %v356 = vadd.f32 0.0, %v355
        %v357 = vpop.f32.mrb[0].mxu0
        %358 = vdwg.mxu0
        %v360 = vsel %vm285, %v274, 0
        %362 = vmatprep.subr.mxu0 0.0
        %363 = vmatpush1.msra.mxu0 %v268
        %364 = vmatprep.subr.mxu0 0.0
        %365 = vmatpush1.msra.mxu0 %v269
        %366 = vmatprep.subr.mxu0 0.0
        %367 = vmatpush1.msra.mxu0 0.0
        %368 = vmatprep.subr.mxu0 0.0
        %369 = vmatpush1.msra.mxu0 0.0
        %370 = vmatprep.subr.mxu0 0.0
        %371 = vmatpush1.msra.mxu0 0.0
        %372 = vmatprep.subr.mxu0 0.0
        %373 = vmatpush1.msra.mxu0 0.0
        %374 = vmatprep.subr.mxu0 0.0
        %375 = vmatpush1.msra.mxu0 0.0
        %376 = vmatprep.subr.mxu0 0.0
        %377 = vmatpush1.msra.mxu0 0.0
        %378 = vmatprep.subr.mxu0 0.0
        %379 = vmatpush1.msra.mxu0 0.0
        %380 = vmatprep.subr.mxu0 0.0
        %381 = vmatpush1.msra.mxu0 0.0
        %382 = vmatprep.subr.mxu0 0.0
        %383 = vmatpush1.msra.mxu0 0.0
        %384 = vmatprep.subr.mxu0 0.0
        %385 = vmatpush1.msra.mxu0 0.0
        %386 = vmatprep.subr.mxu0 0.0
        %387 = vmatpush1.msra.mxu0 0.0
        %388 = vmatprep.subr.mxu0 0.0
        %389 = vmatpush1.msra.mxu0 0.0
        %390 = vmatprep.subr.mxu0 0.0
        %391 = vmatpush1.msra.mxu0 0.0
        %392 = vmatprep.subr.mxu0 0.0
        %393 = vmatpush1.msra.mxu0 0.0
        %394 = vmatprep.subr.mxu0 0.0
        %395 = vmatpush1.msra.mxu0 0.0
        %396 = vmatprep.subr.mxu0 0.0
        %397 = vmatpush1.msra.mxu0 0.0
        %398 = vmatprep.subr.mxu0 0.0
        %399 = vmatpush1.msra.mxu0 0.0
        %400 = vmatprep.subr.mxu0 0.0
        %401 = vmatpush1.msra.mxu0 0.0
        %402 = vmatprep.subr.mxu0 0.0
        %403 = vmatpush1.msra.mxu0 0.0
        %404 = vmatprep.subr.mxu0 0.0
        %405 = vmatpush1.msra.mxu0 0.0
        %406 = vmatprep.subr.mxu0 0.0
        %407 = vmatpush1.msra.mxu0 0.0
        %408 = vmatprep.subr.mxu0 0.0
        %409 = vmatpush1.msra.mxu0 0.0
        %410 = vmatprep.subr.mxu0 0.0
        %411 = vmatpush1.msra.mxu0 0.0
        %412 = vmatprep.subr.mxu0 0.0
        %413 = vmatpush1.msra.mxu0 0.0
        %414 = vmatprep.subr.mxu0 0.0
        %415 = vmatpush1.msra.mxu0 0.0
        %416 = vmatprep.subr.mxu0 0.0
        %417 = vmatpush1.msra.mxu0 0.0
        %418 = vmatprep.subr.mxu0 0.0
        %419 = vmatpush1.msra.mxu0 0.0
        %420 = vmatprep.subr.mxu0 0.0
        %421 = vmatpush1.msra.mxu0 0.0
        %422 = vmatprep.subr.mxu0 0.0
        %423 = vmatpush1.msra.mxu0 0.0
        %424 = vmatprep.subr.mxu0 0.0
        %425 = vmatpush1.msra.mxu0 0.0
        %426 = vmatprep.mubr.f32.mxu0 0.0
        %427 = vmatmul.mubr.f32.gmra.mrb[0].mxu0 %v360
        %v428 = vpop.f32.mrb[0].mxu0
        %v429 = vadd.f32 %v356, %v428
        %v430 = vpop.f32.mrb[0].mxu0
        %431 = vdwg.mxu0
        %vm432 = vcmask 261120
        %433 = vst.msk [vmem:[%s267] sm:$0xff] %vm432, %v429
        %v435 = vsel %vm285, %v280, 0
        %437 = vmatprep.subr.mxu0 0.0
        %438 = vmatpush1.msra.mxu0 %v270
        %439 = vmatprep.subr.mxu0 0.0
        %440 = vmatpush1.msra.mxu0 %v271
        %441 = vmatprep.subr.mxu0 0.0
        %442 = vmatpush1.msra.mxu0 0.0
        %443 = vmatprep.subr.mxu0 0.0
        %444 = vmatpush1.msra.mxu0 0.0
        %445 = vmatprep.subr.mxu0 0.0
        %446 = vmatpush1.msra.mxu0 0.0
        %447 = vmatprep.subr.mxu0 0.0
        %448 = vmatpush1.msra.mxu0 0.0
        %449 = vmatprep.subr.mxu0 0.0
        %450 = vmatpush1.msra.mxu0 0.0
        %451 = vmatprep.subr.mxu0 0.0
        %452 = vmatpush1.msra.mxu0 0.0
        %453 = vmatprep.subr.mxu0 0.0
        %454 = vmatpush1.msra.mxu0 0.0
        %455 = vmatprep.subr.mxu0 0.0
        %456 = vmatpush1.msra.mxu0 0.0
        %457 = vmatprep.subr.mxu0 0.0
        %458 = vmatpush1.msra.mxu0 0.0
        %459 = vmatprep.subr.mxu0 0.0
        %460 = vmatpush1.msra.mxu0 0.0
        %461 = vmatprep.subr.mxu0 0.0
        %462 = vmatpush1.msra.mxu0 0.0
        %463 = vmatprep.subr.mxu0 0.0
        %464 = vmatpush1.msra.mxu0 0.0
        %465 = vmatprep.subr.mxu0 0.0
        %466 = vmatpush1.msra.mxu0 0.0
        %467 = vmatprep.subr.mxu0 0.0
        %468 = vmatpush1.msra.mxu0 0.0
        %469 = vmatprep.subr.mxu0 0.0
        %470 = vmatpush1.msra.mxu0 0.0
        %471 = vmatprep.subr.mxu0 0.0
        %472 = vmatpush1.msra.mxu0 0.0
        %473 = vmatprep.subr.mxu0 0.0
        %474 = vmatpush1.msra.mxu0 0.0
        %475 = vmatprep.subr.mxu0 0.0
        %476 = vmatpush1.msra.mxu0 0.0
        %477 = vmatprep.subr.mxu0 0.0
        %478 = vmatpush1.msra.mxu0 0.0
        %479 = vmatprep.subr.mxu0 0.0
        %480 = vmatpush1.msra.mxu0 0.0
        %481 = vmatprep.subr.mxu0 0.0
        %482 = vmatpush1.msra.mxu0 0.0
        %483 = vmatprep.subr.mxu0 0.0
        %484 = vmatpush1.msra.mxu0 0.0
        %485 = vmatprep.subr.mxu0 0.0
        %486 = vmatpush1.msra.mxu0 0.0
        %487 = vmatprep.subr.mxu0 0.0
        %488 = vmatpush1.msra.mxu0 0.0
        %489 = vmatprep.subr.mxu0 0.0
        %490 = vmatpush1.msra.mxu0 0.0
        %491 = vmatprep.subr.mxu0 0.0
        %492 = vmatpush1.msra.mxu0 0.0
        %493 = vmatprep.subr.mxu0 0.0
        %494 = vmatpush1.msra.mxu0 0.0
        %495 = vmatprep.subr.mxu0 0.0
        %496 = vmatpush1.msra.mxu0 0.0
        %497 = vmatprep.subr.mxu0 0.0
        %498 = vmatpush1.msra.mxu0 0.0
        %499 = vmatprep.subr.mxu0 0.0
        %500 = vmatpush1.msra.mxu0 0.0
        %501 = vmatprep.mubr.f32.mxu0 0.0
        %502 = vmatmul.mubr.f32.gmra.mrb[0].mxu0 %v435
        %v503 = vpop.f32.mrb[0].mxu0
        %v504 = vadd.f32 0.0, %v503
        %v505 = vpop.f32.mrb[0].mxu0
        %506 = vdwg.mxu0
        %v508 = vsel %vm285, %v278, 0
        %510 = vmatprep.subr.mxu0 0.0
        %511 = vmatpush1.msra.mxu0 %v268
        %512 = vmatprep.subr.mxu0 0.0
        %513 = vmatpush1.msra.mxu0 %v269
        %514 = vmatprep.subr.mxu0 0.0
        %515 = vmatpush1.msra.mxu0 0.0
        %516 = vmatprep.subr.mxu0 0.0
        %517 = vmatpush1.msra.mxu0 0.0
        %518 = vmatprep.subr.mxu0 0.0
        %519 = vmatpush1.msra.mxu0 0.0
        %520 = vmatprep.subr.mxu0 0.0
        %521 = vmatpush1.msra.mxu0 0.0
        %522 = vmatprep.subr.mxu0 0.0
        %523 = vmatpush1.msra.mxu0 0.0
        %524 = vmatprep.subr.mxu0 0.0
        %525 = vmatpush1.msra.mxu0 0.0
        %526 = vmatprep.subr.mxu0 0.0
        %527 = vmatpush1.msra.mxu0 0.0
        %528 = vmatprep.subr.mxu0 0.0
        %529 = vmatpush1.msra.mxu0 0.0
        %530 = vmatprep.subr.mxu0 0.0
        %531 = vmatpush1.msra.mxu0 0.0
        %532 = vmatprep.subr.mxu0 0.0
        %533 = vmatpush1.msra.mxu0 0.0
        %534 = vmatprep.subr.mxu0 0.0
        %535 = vmatpush1.msra.mxu0 0.0
        %536 = vmatprep.subr.mxu0 0.0
        %537 = vmatpush1.msra.mxu0 0.0
        %538 = vmatprep.subr.mxu0 0.0
        %539 = vmatpush1.msra.mxu0 0.0
        %540 = vmatprep.subr.mxu0 0.0
        %541 = vmatpush1.msra.mxu0 0.0
        %542 = vmatprep.subr.mxu0 0.0
        %543 = vmatpush1.msra.mxu0 0.0
        %544 = vmatprep.subr.mxu0 0.0
        %545 = vmatpush1.msra.mxu0 0.0
        %546 = vmatprep.subr.mxu0 0.0
        %547 = vmatpush1.msra.mxu0 0.0
        %548 = vmatprep.subr.mxu0 0.0
        %549 = vmatpush1.msra.mxu0 0.0
        %550 = vmatprep.subr.mxu0 0.0
        %551 = vmatpush1.msra.mxu0 0.0
        %552 = vmatprep.subr.mxu0 0.0
        %553 = vmatpush1.msra.mxu0 0.0
        %554 = vmatprep.subr.mxu0 0.0
        %555 = vmatpush1.msra.mxu0 0.0
        %556 = vmatprep.subr.mxu0 0.0
        %557 = vmatpush1.msra.mxu0 0.0
        %558 = vmatprep.subr.mxu0 0.0
        %559 = vmatpush1.msra.mxu0 0.0
        %560 = vmatprep.subr.mxu0 0.0
        %561 = vmatpush1.msra.mxu0 0.0
        %562 = vmatprep.subr.mxu0 0.0
        %563 = vmatpush1.msra.mxu0 0.0
        %564 = vmatprep.subr.mxu0 0.0
        %565 = vmatpush1.msra.mxu0 0.0
        %566 = vmatprep.subr.mxu0 0.0
        %567 = vmatpush1.msra.mxu0 0.0
        %568 = vmatprep.subr.mxu0 0.0
        %569 = vmatpush1.msra.mxu0 0.0
        %570 = vmatprep.subr.mxu0 0.0
        %571 = vmatpush1.msra.mxu0 0.0
        %572 = vmatprep.subr.mxu0 0.0
        %573 = vmatpush1.msra.mxu0 0.0
        %574 = vmatprep.mubr.f32.mxu0 0.0
        %575 = vmatmul.mubr.f32.gmra.mrb[0].mxu0 %v508
        %v576 = vpop.f32.mrb[0].mxu0
        %v577 = vadd.f32 %v504, %v576
        %v578 = vpop.f32.mrb[0].mxu0
        %579 = vdwg.mxu0
        %581 = vrot.lane.b32.xlu0 %v577, 32
        %v582 = vpop.permute.xlu0 %581
        %vm584 = vcmask 523520
        %585 = vst.msk [vmem:[%s267] sm:$0xff] %vm584, %v582
        %v587 = vsel %vm285, %v282, 0
        %589 = vmatprep.subr.mxu0 0.0
        %590 = vmatpush1.msra.mxu0 %v272
        %591 = vmatprep.subr.mxu0 0.0
        %592 = vmatpush1.msra.mxu0 %v273
        %593 = vmatprep.subr.mxu0 0.0
        %594 = vmatpush1.msra.mxu0 0.0
        %595 = vmatprep.subr.mxu0 0.0
        %596 = vmatpush1.msra.mxu0 0.0
        %597 = vmatprep.subr.mxu0 0.0
        %598 = vmatpush1.msra.mxu0 0.0
        %599 = vmatprep.subr.mxu0 0.0
        %600 = vmatpush1.msra.mxu0 0.0
        %601 = vmatprep.subr.mxu0 0.0
        %602 = vmatpush1.msra.mxu0 0.0
        %603 = vmatprep.subr.mxu0 0.0
        %604 = vmatpush1.msra.mxu0 0.0
        %605 = vmatprep.subr.mxu0 0.0
        %606 = vmatpush1.msra.mxu0 0.0
        %607 = vmatprep.subr.mxu0 0.0
        %608 = vmatpush1.msra.mxu0 0.0
        %609 = vmatprep.subr.mxu0 0.0
        %610 = vmatpush1.msra.mxu0 0.0
        %611 = vmatprep.subr.mxu0 0.0
        %612 = vmatpush1.msra.mxu0 0.0
        %613 = vmatprep.subr.mxu0 0.0
        %614 = vmatpush1.msra.mxu0 0.0
        %615 = vmatprep.subr.mxu0 0.0
        %616 = vmatpush1.msra.mxu0 0.0
        %617 = vmatprep.subr.mxu0 0.0
        %618 = vmatpush1.msra.mxu0 0.0
        %619 = vmatprep.subr.mxu0 0.0
        %620 = vmatpush1.msra.mxu0 0.0
        %621 = vmatprep.subr.mxu0 0.0
        %622 = vmatpush1.msra.mxu0 0.0
        %623 = vmatprep.subr.mxu0 0.0
        %624 = vmatpush1.msra.mxu0 0.0
        %625 = vmatprep.subr.mxu0 0.0
        %626 = vmatpush1.msra.mxu0 0.0
        %627 = vmatprep.subr.mxu0 0.0
        %628 = vmatpush1.msra.mxu0 0.0
        %629 = vmatprep.subr.mxu0 0.0
        %630 = vmatpush1.msra.mxu0 0.0
        %631 = vmatprep.subr.mxu0 0.0
        %632 = vmatpush1.msra.mxu0 0.0
        %633 = vmatprep.subr.mxu0 0.0
        %634 = vmatpush1.msra.mxu0 0.0
        %635 = vmatprep.subr.mxu0 0.0
        %636 = vmatpush1.msra.mxu0 0.0
        %637 = vmatprep.subr.mxu0 0.0
        %638 = vmatpush1.msra.mxu0 0.0
        %639 = vmatprep.subr.mxu0 0.0
        %640 = vmatpush1.msra.mxu0 0.0
        %641 = vmatprep.subr.mxu0 0.0
        %642 = vmatpush1.msra.mxu0 0.0
        %643 = vmatprep.subr.mxu0 0.0
        %644 = vmatpush1.msra.mxu0 0.0
        %645 = vmatprep.subr.mxu0 0.0
        %646 = vmatpush1.msra.mxu0 0.0
        %647 = vmatprep.subr.mxu0 0.0
        %648 = vmatpush1.msra.mxu0 0.0
        %649 = vmatprep.subr.mxu0 0.0
        %650 = vmatpush1.msra.mxu0 0.0
        %651 = vmatprep.subr.mxu0 0.0
        %652 = vmatpush1.msra.mxu0 0.0
        %653 = vmatprep.mubr.f32.mxu0 0.0
        %654 = vmatmul.mubr.f32.gmra.mrb[0].mxu0 %v587
        %v655 = vpop.f32.mrb[0].mxu0
        %v656 = vadd.f32 0.0, %v655
        %v657 = vpop.f32.mrb[0].mxu0
        %658 = vdwg.mxu0
        %s659 = scalar_lea.vmem %s267, 8 [#allocation3]
        %660 = vst.msk [vmem:[%s659] sm:$0xff] %vm432, %v656
        %662 = vrot.lane.b32.xlu0 %v656, 32
        %v663 = vpop.permute.xlu0 %662
        %665 = vst.msk [vmem:[%s659] sm:$0xff] %vm584, %v663
        %v667 = vsel %vm285, %v284, 0
        %669 = vmatprep.subr.mxu0 0.0
        %670 = vmatpush1.msra.mxu0 %v272
        %671 = vmatprep.subr.mxu0 0.0
        %672 = vmatpush1.msra.mxu0 %v273
        %673 = vmatprep.subr.mxu0 0.0
        %674 = vmatpush1.msra.mxu0 0.0
        %675 = vmatprep.subr.mxu0 0.0
        %676 = vmatpush1.msra.mxu0 0.0
        %677 = vmatprep.subr.mxu0 0.0
        %678 = vmatpush1.msra.mxu0 0.0
        %679 = vmatprep.subr.mxu0 0.0
        %680 = vmatpush1.msra.mxu0 0.0
        %681 = vmatprep.subr.mxu0 0.0
        %682 = vmatpush1.msra.mxu0 0.0
        %683 = vmatprep.subr.mxu0 0.0
        %684 = vmatpush1.msra.mxu0 0.0
        %685 = vmatprep.subr.mxu0 0.0
        %686 = vmatpush1.msra.mxu0 0.0
        %687 = vmatprep.subr.mxu0 0.0
        %688 = vmatpush1.msra.mxu0 0.0
        %689 = vmatprep.subr.mxu0 0.0
        %690 = vmatpush1.msra.mxu0 0.0
        %691 = vmatprep.subr.mxu0 0.0
        %692 = vmatpush1.msra.mxu0 0.0
        %693 = vmatprep.subr.mxu0 0.0
        %694 = vmatpush1.msra.mxu0 0.0
        %695 = vmatprep.subr.mxu0 0.0
        %696 = vmatpush1.msra.mxu0 0.0
        %697 = vmatprep.subr.mxu0 0.0
        %698 = vmatpush1.msra.mxu0 0.0
        %699 = vmatprep.subr.mxu0 0.0
        %700 = vmatpush1.msra.mxu0 0.0
        %701 = vmatprep.subr.mxu0 0.0
        %702 = vmatpush1.msra.mxu0 0.0
        %703 = vmatprep.subr.mxu0 0.0
        %704 = vmatpush1.msra.mxu0 0.0
        %705 = vmatprep.subr.mxu0 0.0
        %706 = vmatpush1.msra.mxu0 0.0
        %707 = vmatprep.subr.mxu0 0.0
        %708 = vmatpush1.msra.mxu0 0.0
        %709 = vmatprep.subr.mxu0 0.0
        %710 = vmatpush1.msra.mxu0 0.0
        %711 = vmatprep.subr.mxu0 0.0
        %712 = vmatpush1.msra.mxu0 0.0
        %713 = vmatprep.subr.mxu0 0.0
        %714 = vmatpush1.msra.mxu0 0.0
        %715 = vmatprep.subr.mxu0 0.0
        %716 = vmatpush1.msra.mxu0 0.0
        %717 = vmatprep.subr.mxu0 0.0
        %718 = vmatpush1.msra.mxu0 0.0
        %719 = vmatprep.subr.mxu0 0.0
        %720 = vmatpush1.msra.mxu0 0.0
        %721 = vmatprep.subr.mxu0 0.0
        %722 = vmatpush1.msra.mxu0 0.0
        %723 = vmatprep.subr.mxu0 0.0
        %724 = vmatpush1.msra.mxu0 0.0
        %725 = vmatprep.subr.mxu0 0.0
        %726 = vmatpush1.msra.mxu0 0.0
        %727 = vmatprep.subr.mxu0 0.0
        %728 = vmatpush1.msra.mxu0 0.0
        %729 = vmatprep.subr.mxu0 0.0
        %730 = vmatpush1.msra.mxu0 0.0
        %731 = vmatprep.subr.mxu0 0.0
        %732 = vmatpush1.msra.mxu0 0.0
        %733 = vmatprep.mubr.f32.mxu0 0.0
        %734 = vmatmul.mubr.f32.gmra.mrb[0].mxu0 %v667
        %v735 = vpop.f32.mrb[0].mxu0
        %v736 = vadd.f32 0.0, %v735
        %v737 = vpop.f32.mrb[0].mxu0
        %738 = vdwg.mxu0
        %s739 = scalar_lea.vmem %s267, 16 [#allocation3]
        %740 = vst.msk [vmem:[%s739] sm:$0xff] %vm432, %v736
        %742 = vrot.lane.b32.xlu0 %v736, 32
        %v743 = vpop.permute.xlu0 %742
        %745 = vst.msk [vmem:[%s739] sm:$0xff] %vm584, %v743
        %s746 = sand.u32 %s131, 1
        %s747 = scalar_lea.sflag [#allocation4], %s746
        %s748 = sand.u32 %s131, 1
        %s749 = smul.addr %s748, 24
        %s750 = scalar_lea.vmem [#allocation3], %s749
        // Predicated region
        $region75: #{tpu_custom_call.1} parent=69 // pred_check
          %p751 = pneg %p141
        $region76: #{tpu_custom_call.1} parent=69 // pred_check_branch
          %753 = sbr.rel (%p751) target = $region78
        $region77: #{tpu_custom_call.1} parent=69 // pred_region
          %s755 = ssub.s32 384, 384
          %756 = vsyncadd %s747, %s755
          %s757 = smul.addr %s22, 9
          %s758 = sadd.s32 %s23, %s757
          %s759 = smul.addr %s758, 128
          %s760 = scalar_lea.hbm %s4, %s759
          %s761 = sshll.u32 %s750, 4
          %s762 = int_to_ptr.vmem [resolvable:$true] %s761
          %767 = dma.vmem_to_hbm [thread:$0]  %s762, 384, %s760, %s747, 128, 384, 8
        $region78: #{tpu_custom_call.1} parent=69 // pred_fallthru
          _
      $region70: #{tpu_custom_call.1} parent=5 // pred_fallthru
        _
      %p768 = scmp.le.s32.totalorder 2, %s13
      // Predicated region
      $region79: #{tpu_custom_call.1} parent=5 // pred_check
        %p769 = pneg %p768
      $region80: #{tpu_custom_call.1} parent=5 // pred_check_branch
        %771 = sbr.rel (%p769) target = $region82
      $region81: #{tpu_custom_call.1} parent=5 // pred_region
        %s772 = ssub.s32 %s13, 2
        // Predicated region
        $region83: #{tpu_custom_call.1} parent=81 // pred_check
          %p773 = pneg %p147
        $region84: #{tpu_custom_call.1} parent=81 // pred_check_branch
          %775 = sbr.rel (%p773) target = $region86
        $region85: #{tpu_custom_call.1} parent=81 // pred_region
          %s776 = sand.u32 %s132, 1
          %s777 = scalar_lea.sflag [#allocation4], %s776
          %s778 = sand.u32 %s132, 1
          %s779 = smul.addr %s778, 24
          %s780 = scalar_lea.vmem [#allocation3], %s779
          %781 = dma.done %s777, 384
        $region86: #{tpu_custom_call.1} parent=81 // pred_fallthru
          _
      $region82: #{tpu_custom_call.1} parent=5 // pred_fallthru
        _
    $region6: #{tpu_custom_call.1} parent=1 // loop_footer
      %s17 = sadd.s32 1, %s13
    $region7: #{tpu_custom_call.1} parent=1 // loop_footer_branch
      %12 = sbr.rel target = $region3
    $region8: #{tpu_custom_call.1} parent=1 // loop_exit
      _
    %782 = vsyncpa [#allocation4], 1
    %s783 = scalar_lea.sflag [#allocation4], 1
    %784 = vsyncpa %s783, 1

</llo_original>
